<compile_context>
chip_gen: v7x
topology: tpu7x:2x2x1
jax: 0.10.0
libtpu: 0.0.40
codegen_flags: <defaults>
</compile_context>

<pallas_src>
import functools

import jax
import jax.numpy as jnp
from jax.experimental import pallas as pl
from jax.experimental.pallas import tpu as pltpu


def _round_up(x: int, m: int) -> int:
    return ((x + m - 1) // m) * m


# VMEM budgets (bytes). Sized for the tightest generation (v7x: 64 MiB physical,
# 32 MiB scoped default); safe on v5e/v6e (128 MiB physical) once the scoped
# limit is raised explicitly via vmem_limit_bytes below.
_VMEM_TILE_BUDGET = 40 * 1024 * 1024    # working-set budget used to size tiles
_VMEM_WEIGHT_BUDGET = 20 * 1024 * 1024  # 2x-buffered weight blocks must fit here
_VMEM_LIMIT_BYTES = 48 * 1024 * 1024    # scoped-VMEM limit handed to Mosaic


def _mlp_kernel(x_ref, w1_ref, b1_ref, w2_ref, b2_ref, o_ref, acc_ref):
    """One (batch-tile, hidden-tile) step of y = relu(x @ W1 + b1) @ W2 + b2."""
    k = pl.program_id(1)

    @pl.when(k == 0)
    def _():
        acc_ref[...] = jnp.zeros_like(acc_ref)

    x = x_ref[...]                                            # (tile_b, in_n)
    # First Linear + ReLU: MXU matmul, f32 accumulation; bias add + ReLU in f32
    # (v5e's VPU has no bf16 path).
    h = jnp.dot(x.astype(w1_ref.dtype), w1_ref[...],
                preferred_element_type=jnp.float32)           # (tile_b, hid_tile)
    h = jnp.maximum(h + b1_ref[...], 0.0)
    # Second Linear, accumulated across hidden tiles in an f32 VMEM scratch.
    acc_ref[...] += jnp.dot(h.astype(w2_ref.dtype), w2_ref[...],
                            preferred_element_type=jnp.float32)

    @pl.when(k == pl.num_programs(1) - 1)
    def _():
        o_ref[...] = (acc_ref[...] + b2_ref[...]).astype(o_ref.dtype)


@functools.partial(jax.jit, static_argnames=("tile_b", "weight_dtype"))
def net_forward(x, w1, b1, w2, b2, *, tile_b=None, weight_dtype=None):
    """Fused MLP forward.

    x  : (B, input_num)
    w1 : (input_num, hidden_num)   b1 : (hidden_num,)
    w2 : (hidden_num, output_num)  b2 : (output_num,)
    weight_dtype : optional (e.g. jnp.bfloat16) cast for W1/W2 only (v6e/v7x MXU
                   throughput + halved weight bytes); biases stay in f32.
    returns (B, output_num)
    """
    B, in_n = x.shape
    hid_n = w1.shape[1]
    out_n = w2.shape[1]
    out_dtype = x.dtype
    x_isz = jnp.dtype(x.dtype).itemsize

    if weight_dtype is not None:
        w1 = w1.astype(weight_dtype)
        w2 = w2.astype(weight_dtype)
    w_isz = jnp.dtype(w1.dtype).itemsize
    b_isz = jnp.dtype(b1.dtype).itemsize

    b1_2d = b1.reshape(1, hid_n)
    b2_2d = b2.reshape(1, out_n)

    def weight_bytes(hid):
        return (in_n * hid + hid * out_n) * w_isz + (hid + out_n) * b_isz

    # --- hidden (K) tiling: keep 2x-buffered weight blocks inside budget -----
    # (BlockSpec double-buffers even constant-index blocks; budget for 2x.
    #  pipeline_mode=pl.Buffered(1) could halve that but is not required.)
    if 2 * weight_bytes(hid_n) <= _VMEM_WEIGHT_BUDGET:
        hid_tile, hid_pad = hid_n, hid_n      # weights fully VMEM-resident, 1 K step
    else:
        per_col = (in_n + out_n) * w_isz + b_isz
        hid_tile = (_VMEM_WEIGHT_BUDGET // 2 - out_n * b_isz) // per_col
        hid_tile = max(128, (hid_tile // 128) * 128)
        hid_pad = _round_up(hid_n, hid_tile)
        # Zero-pad only the (small) weights/bias along hidden — exact: padded
        # hidden columns give h = relu(x@0 + 0) = 0 and padded W2 rows are 0.
        w1 = jnp.pad(w1, ((0, 0), (0, hid_pad - hid_n)))
        b1_2d = jnp.pad(b1_2d, ((0, 0), (0, hid_pad - hid_n)))
        w2 = jnp.pad(w2, ((0, hid_pad - hid_n), (0, 0)))
    num_h = hid_pad // hid_tile

    # --- batch tiling derived from the VMEM budget (no padding of x/out) -----
    if tile_b is None:
        per_row = (2 * (in_n + out_n) * x_isz   # double-buffered x/out tiles
                   + hid_tile * 4               # f32 hidden intermediate
                   + out_n * 4)                 # f32 accumulator scratch
        avail = _VMEM_TILE_BUDGET - 2 * weight_bytes(hid_tile)
        tile_b = max(8, avail // per_row)
        if tile_b >= 128:
            tile_b = min(2048, (tile_b // 128) * 128)
        else:
            tile_b = (tile_b // 8) * 8
    tile_b = max(8, _round_up(int(tile_b), 8))   # sublane constraint
    tile_b = min(tile_b, _round_up(B, 8))        # don't exceed the batch

    grid = (pl.cdiv(B, tile_b), num_h)           # reduction (hidden) axis last

    flops = 2 * B * in_n * hid_n + 2 * B * hid_n * out_n
    bytes_accessed = int(x_isz * B * (in_n + out_n)
                         + w_isz * (in_n * hid_pad + hid_pad * out_n)
                         + b_isz * (hid_pad + out_n))

    return pl.pallas_call(
        _mlp_kernel,
        out_shape=jax.ShapeDtypeStruct((B, out_n), out_dtype),
        grid=grid,
        in_specs=[
            pl.BlockSpec((tile_b, in_n), lambda i, k: (i, 0)),     # x tile (pipelined)
            pl.BlockSpec((in_n, hid_tile), lambda i, k: (0, k)),   # W1 column tile
            pl.BlockSpec((1, hid_tile), lambda i, k: (0, k)),      # b1 tile
            pl.BlockSpec((hid_tile, out_n), lambda i, k: (k, 0)),  # W2 row tile
            pl.BlockSpec((1, out_n), lambda i, k: (0, 0)),         # b2 (resident)
        ],
        out_specs=pl.BlockSpec((tile_b, out_n), lambda i, k: (i, 0)),
        scratch_shapes=[pltpu.VMEM((tile_b, out_n), jnp.float32)],  # f32 accumulator
        compiler_params=pltpu.CompilerParams(
            dimension_semantics=("parallel", "arbitrary"),
            vmem_limit_bytes=_VMEM_LIMIT_BYTES,
        ),
        cost_estimate=pl.CostEstimate(
            flops=flops, transcendentals=0, bytes_accessed=bytes_accessed
        ),
    )(x, w1, b1_2d, w2, b2_2d)


def init_params(key, input_num, hidden_num, output_num, dtype=jnp.float32):
    """Deterministic init mimicking torch.nn.Linear default (U[-1/sqrt(fan_in), 1/sqrt(fan_in)])."""
    k1, k2, k3, k4 = jax.random.split(key, 4)
    lim1 = 1.0 / jnp.sqrt(jnp.asarray(input_num, dtype))
    lim2 = 1.0 / jnp.sqrt(jnp.asarray(hidden_num, dtype))
    # stored as (in, out) == transpose of torch's (out, in)
    w1 = jax.random.uniform(k1, (input_num, hidden_num), dtype, -lim1, lim1)
    b1 = jax.random.uniform(k2, (hidden_num,), dtype, -lim1, lim1)
    w2 = jax.random.uniform(k3, (hidden_num, output_num), dtype, -lim2, lim2)
    b2 = jax.random.uniform(k4, (output_num,), dtype, -lim2, lim2)
    return w1, b1, w2, b2


if __name__ == "__main__":
    input_num, hidden_num, output_num = 16, 32, 4
    key = jax.random.PRNGKey(0)
    kx, kp, kx2 = jax.random.split(key, 3)
    w1, b1, w2, b2 = init_params(kp, input_num, hidden_num, output_num)

    def ref(xv):
        return jnp.maximum(xv @ w1 + b1, 0.0) @ w2 + b2

    # Case 1: aligned small batch.
    x = jax.random.normal(kx, (8, input_num), jnp.float32)
    out = jax.block_until_ready(net_forward(x, w1, b1, w2, b2))
    assert out.shape == (8, output_num)
    assert jnp.allclose(out, ref(x), atol=1e-5, rtol=1e-5)

    # Case 2: ragged batch (exercises the cdiv grid / partial last tile path).
    x2 = jax.random.normal(kx2, (10, input_num), jnp.float32)
    out2 = jax.block_until_ready(net_forward(x2, w1, b1, w2, b2))
    assert out2.shape == (10, output_num)
    assert jnp.allclose(out2, ref(x2), atol=1e-5, rtol=1e-5)

    print("KERNEL_OK")
</pallas_src>

<mosaic_0001>
module attributes {stable_mosaic.version = 11 : i64} {
  func.func @_mlp_kernel(%arg0: i32, %arg1: i32, %arg2: memref<8x16xf32, #tpu.memory_space<vmem>>, %arg3: memref<16x32xf32, #tpu.memory_space<vmem>>, %arg4: memref<1x32xf32, #tpu.memory_space<vmem>>, %arg5: memref<32x4xf32, #tpu.memory_space<vmem>>, %arg6: memref<1x4xf32, #tpu.memory_space<vmem>>, %arg7: memref<8x4xf32, #tpu.memory_space<vmem>>, %arg8: memref<8x4xf32, #tpu.memory_space<vmem>>) attributes {dimension_semantics = [#tpu.dimension_semantics<parallel>, #tpu.dimension_semantics<arbitrary>], iteration_bounds = array<i64: 1, 1>, scalar_prefetch = 0 : i64, scratch_operands = 1 : i64, tpu.core_type = #tpu.core_type<tc>, window_params = [{transform_indices = @transform_0, window_bounds = array<i64: 8, 16>}, {transform_indices = @transform_1, window_bounds = array<i64: 16, 32>}, {transform_indices = @transform_2, window_bounds = array<i64: 1, 32>}, {transform_indices = @transform_3, window_bounds = array<i64: 32, 4>}, {pipeline_mode = #tpu.pipeline_mode<synchronous>, transform_indices = @transform_4, window_bounds = array<i64: 1, 4>}, {transform_indices = @transform_5, window_bounds = array<i64: 8, 4>}]} {
    %c0_i32 = arith.constant 0 : i32
    %0 = arith.cmpi eq, %arg1, %c0_i32 : i32
    %1 = arith.extui %0 : i1 to i32
    %c0_i32_0 = arith.constant 0 : i32
    %2 = arith.cmpi ne, %1, %c0_i32_0 : i32
    scf.if %2 {
      %cst_16 = arith.constant 0.000000e+00 : f32
      %19 = vector.broadcast %cst_16 : f32 to vector<8x4xf32>
      %c0_17 = arith.constant 0 : index
      %c0_18 = arith.constant 0 : index
      %20 = vector.load %arg8[%c0_17, %c0_18] : memref<8x4xf32, #tpu.memory_space<vmem>>, vector<8x4xf32>
      tpu.vector_store %arg8[%c0_17, %c0_18], %19 {strides = array<i32>} : memref<8x4xf32, #tpu.memory_space<vmem>>, vector<8x4xf32>,
    } else {
    }
    %c0 = arith.constant 0 : index
    %c0_1 = arith.constant 0 : index
    %3 = vector.load %arg2[%c0, %c0_1] : memref<8x16xf32, #tpu.memory_space<vmem>>, vector<8x16xf32>
    %c0_2 = arith.constant 0 : index
    %c0_3 = arith.constant 0 : index
    %4 = vector.load %arg3[%c0_2, %c0_3] : memref<16x32xf32, #tpu.memory_space<vmem>>, vector<16x32xf32>
    %cst = arith.constant dense<0.000000e+00> : vector<8x32xf32>
    %5 = tpu.matmul %3, %4, %cst {dimension_numbers = #tpu.dot_dimension_numbers<[1], [0], [0], [1], [0, 0, 1, 1], [], []>} : vector<8x16xf32>, vector<16x32xf32>, vector<8x32xf32> -> vector<8x32xf32>
    %c0_4 = arith.constant 0 : index
    %c0_5 = arith.constant 0 : index
    %6 = vector.load %arg4[%c0_4, %c0_5] : memref<1x32xf32, #tpu.memory_space<vmem>>, vector<1x32xf32>
    %7 = vector.broadcast %6 : vector<1x32xf32> to vector<8x32xf32>
    %8 = arith.addf %5, %7 : vector<8x32xf32>
    %cst_6 = arith.constant 0.000000e+00 : f32
    %9 = vector.broadcast %cst_6 : f32 to vector<8x32xf32>
    %10 = arith.maximumf %8, %9 : vector<8x32xf32>
    %c0_7 = arith.constant 0 : index
    %c0_8 = arith.constant 0 : index
    %11 = vector.load %arg8[%c0_7, %c0_8] : memref<8x4xf32, #tpu.memory_space<vmem>>, vector<8x4xf32>
    %c0_9 = arith.constant 0 : index
    %c0_10 = arith.constant 0 : index
    %12 = vector.load %arg5[%c0_9, %c0_10] : memref<32x4xf32, #tpu.memory_space<vmem>>, vector<32x4xf32>
    %cst_11 = arith.constant dense<0.000000e+00> : vector<8x4xf32>
    %13 = tpu.matmul %10, %12, %cst_11 {dimension_numbers = #tpu.dot_dimension_numbers<[1], [0], [0], [1], [0, 0, 1, 1], [], []>} : vector<8x32xf32>, vector<32x4xf32>, vector<8x4xf32> -> vector<8x4xf32>
    %14 = arith.addf %11, %13 : vector<8x4xf32>
    %c0_12 = arith.constant 0 : index
    %c0_13 = arith.constant 0 : index
    %15 = vector.load %arg8[%c0_12, %c0_13] : memref<8x4xf32, #tpu.memory_space<vmem>>, vector<8x4xf32>
    tpu.vector_store %arg8[%c0_12, %c0_13], %14 {strides = array<i32>} : memref<8x4xf32, #tpu.memory_space<vmem>>, vector<8x4xf32>,
    %c0_i32_14 = arith.constant 0 : i32
    %16 = arith.cmpi eq, %arg1, %c0_i32_14 : i32
    %17 = arith.extui %16 : i1 to i32
    %c0_i32_15 = arith.constant 0 : i32
    %18 = arith.cmpi ne, %17, %c0_i32_15 : i32
    scf.if %18 {
      %c0_16 = arith.constant 0 : index
      %c0_17 = arith.constant 0 : index
      %19 = vector.load %arg8[%c0_16, %c0_17] : memref<8x4xf32, #tpu.memory_space<vmem>>, vector<8x4xf32>
      %c0_18 = arith.constant 0 : index
      %c0_19 = arith.constant 0 : index
      %20 = vector.load %arg6[%c0_18, %c0_19] : memref<1x4xf32, #tpu.memory_space<vmem>>, vector<1x4xf32>
      %21 = vector.broadcast %20 : vector<1x4xf32> to vector<8x4xf32>
      %22 = arith.addf %19, %21 : vector<8x4xf32>
      %c0_20 = arith.constant 0 : index
      %c0_21 = arith.constant 0 : index
      %23 = vector.load %arg7[%c0_20, %c0_21] : memref<8x4xf32, #tpu.memory_space<vmem>>, vector<8x4xf32>
      tpu.vector_store %arg7[%c0_20, %c0_21], %22 {strides = array<i32>} : memref<8x4xf32, #tpu.memory_space<vmem>>, vector<8x4xf32>,
    } else {
    }
    return
  }
  func.func @transform_0(%arg0: i32, %arg1: i32) -> (i32, i32) {
    %c0_i32 = arith.constant 0 : i32
    %c0_i32_0 = arith.constant 0 : i32
    return %arg0, %c0_i32 : i32, i32
  }
  func.func @transform_1(%arg0: i32, %arg1: i32) -> (i32, i32) {
    %c0_i32 = arith.constant 0 : i32
    %c0_i32_0 = arith.constant 0 : i32
    return %c0_i32, %arg1 : i32, i32
  }
  func.func @transform_2(%arg0: i32, %arg1: i32) -> (i32, i32) {
    %c0_i32 = arith.constant 0 : i32
    %c0_i32_0 = arith.constant 0 : i32
    return %c0_i32, %arg1 : i32, i32
  }
  func.func @transform_3(%arg0: i32, %arg1: i32) -> (i32, i32) {
    %c0_i32 = arith.constant 0 : i32
    %c0_i32_0 = arith.constant 0 : i32
    return %arg1, %c0_i32 : i32, i32
  }
  func.func @transform_4(%arg0: i32, %arg1: i32) -> (i32, i32) {
    %c0_i32 = arith.constant 0 : i32
    %c0_i32_0 = arith.constant 0 : i32
    %c0_i32_1 = arith.constant 0 : i32
    return %c0_i32, %c0_i32_0 : i32, i32
  }
  func.func @transform_5(%arg0: i32, %arg1: i32) -> (i32, i32) {
    %c0_i32 = arith.constant 0 : i32
    %c0_i32_0 = arith.constant 0 : i32
    return %arg0, %c0_i32 : i32, i32
  }
}

</mosaic_0001>

<llo_original>
// kernel: net_forward.1
$region0: #{net_forward.1}
  #allocation0 [shape = 'u32[]', space=smem, size = 0x4, offset = 0x4, fixed_abs, tag = 'smem constant byte address 0x4 - core index']
  #allocation1 [shape = 'u32[144,128]{1,0:T(1,128)}', space=vmem, size = 0x12000, scoped, tag = 'internal scratch']
  #allocation2 [shape = 'f32[8,4]{1,0:T(8,128)}', space=vmem, size = 0x1000, scoped, tag = 'scratch operand']
  %s0 = inlined_call_operand.vmem [shape: f32[8,16], index: 0, kind: input, shape index: {}]
  %s1 = inlined_call_operand.vmem [shape: f32[16,32], index: 1, kind: input, shape index: {}]
  %s2 = inlined_call_operand.vmem [shape: f32[1,32], index: 2, kind: input, shape index: {}]
  %s3 = inlined_call_operand.vmem [shape: f32[32,4], index: 3, kind: input, shape index: {}]
  %s4 = inlined_call_operand.vmem [shape: f32[1,4], index: 4, kind: input, shape index: {}]
  %s5 = inlined_call_operand.vmem [shape: f32[8,4], index: 5, kind: output, shape index: {}]
  %s6 = sld [smem:[#allocation0]]
  $region38: #{net_forward.1} parent=0
    _
  %s8 = ssub.s32 1, %s6
  %s9 = scalar_select 0, %s8, %s6
  // Predicated region
  $region2: #{net_forward.1} parent=0 // pred_check
    _
  $region3: #{net_forward.1} parent=0 // pred_check_branch
    %11 = sbr.rel (0) target = $region5
  $region4: #{net_forward.1} parent=0 // pred_region
    _
  $region5: #{net_forward.1} parent=0 // pred_fallthru
    _
  // Predicated region
  $region6: #{net_forward.1} parent=0 // pred_check
    _
  $region7: #{net_forward.1} parent=0 // pred_check_branch
    %13 = sbr.rel (0) target = $region9
  $region8: #{net_forward.1} parent=0 // pred_region
    _
  $region9: #{net_forward.1} parent=0 // pred_fallthru
    _
  // Predicated region
  $region10: #{net_forward.1} parent=0 // pred_check
    _
  $region11: #{net_forward.1} parent=0 // pred_check_branch
    %15 = sbr.rel (0) target = $region13
  $region12: #{net_forward.1} parent=0 // pred_region
    _
  $region13: #{net_forward.1} parent=0 // pred_fallthru
    _
  // Predicated region
  $region14: #{net_forward.1} parent=0 // pred_check
    _
  $region15: #{net_forward.1} parent=0 // pred_check_branch
    %17 = sbr.rel (0) target = $region17
  $region16: #{net_forward.1} parent=0 // pred_region
    _
  $region17: #{net_forward.1} parent=0 // pred_fallthru
    _
  // Predicated region
  $region18: #{net_forward.1} parent=0 // pred_check
    _
  $region19: #{net_forward.1} parent=0 // pred_check_branch
    %19 = sbr.rel (0) target = $region21
  $region20: #{net_forward.1} parent=0 // pred_region
    _
  $region21: #{net_forward.1} parent=0 // pred_fallthru
    _
  %p20 = scmp.eq.s32.totalorder 0, 0
  // Predicated region
  $region22: #{net_forward.1} parent=0 // pred_check
    %p21 = pneg %p20
  $region23: #{net_forward.1} parent=0 // pred_check_branch
    %23 = sbr.rel (%p21) target = $region25
  $region24: #{net_forward.1} parent=0 // pred_region
    %vm24 = vcmask 31744
    %25 = vst.msk [vmem:[#allocation2] sm:$0xff] %vm24, 0.0
  $region25: #{net_forward.1} parent=0 // pred_fallthru
    _
  %v26 = vld [vmem:[%s0] sm:$0xff]
  %v27 = vld [vmem:[%s1] sm:$0xff]
  %v28 = vld [vmem:[%s1 + $0x8] sm:$0xff]
  %v29 = vld [vmem:[%s2] sm:$0x1]
  %v31 = vlaneseq
  %v32 = vshrl.u32 %v31, 7
  %v33 = vsub.s32 0, %v32
  %v34 = vrot.slane %v29, %v33
  %vm36 = vcmask 130048
  %v38 = vsel %vm36, %v26, 0
  %40 = vmatprep.subr.mxu0 0.0
  %41 = vmatpush1.msra.mxu0 %v27
  %42 = vmatprep.subr.mxu0 0.0
  %43 = vmatpush1.msra.mxu0 %v28
  %44 = vmatprep.subr.mxu0 0.0
  %45 = vmatpush1.msra.mxu0 0.0
  %46 = vmatprep.subr.mxu0 0.0
  %47 = vmatpush1.msra.mxu0 0.0
  %48 = vmatprep.subr.mxu0 0.0
  %49 = vmatpush1.msra.mxu0 0.0
  %50 = vmatprep.subr.mxu0 0.0
  %51 = vmatpush1.msra.mxu0 0.0
  %52 = vmatprep.subr.mxu0 0.0
  %53 = vmatpush1.msra.mxu0 0.0
  %54 = vmatprep.subr.mxu0 0.0
  %55 = vmatpush1.msra.mxu0 0.0
  %56 = vmatprep.subr.mxu0 0.0
  %57 = vmatpush1.msra.mxu0 0.0
  %58 = vmatprep.subr.mxu0 0.0
  %59 = vmatpush1.msra.mxu0 0.0
  %60 = vmatprep.subr.mxu0 0.0
  %61 = vmatpush1.msra.mxu0 0.0
  %62 = vmatprep.subr.mxu0 0.0
  %63 = vmatpush1.msra.mxu0 0.0
  %64 = vmatprep.subr.mxu0 0.0
  %65 = vmatpush1.msra.mxu0 0.0
  %66 = vmatprep.subr.mxu0 0.0
  %67 = vmatpush1.msra.mxu0 0.0
  %68 = vmatprep.subr.mxu0 0.0
  %69 = vmatpush1.msra.mxu0 0.0
  %70 = vmatprep.subr.mxu0 0.0
  %71 = vmatpush1.msra.mxu0 0.0
  %72 = vmatprep.subr.mxu0 0.0
  %73 = vmatpush1.msra.mxu0 0.0
  %74 = vmatprep.subr.mxu0 0.0
  %75 = vmatpush1.msra.mxu0 0.0
  %76 = vmatprep.subr.mxu0 0.0
  %77 = vmatpush1.msra.mxu0 0.0
  %78 = vmatprep.subr.mxu0 0.0
  %79 = vmatpush1.msra.mxu0 0.0
  %80 = vmatprep.subr.mxu0 0.0
  %81 = vmatpush1.msra.mxu0 0.0
  %82 = vmatprep.subr.mxu0 0.0
  %83 = vmatpush1.msra.mxu0 0.0
  %84 = vmatprep.subr.mxu0 0.0
  %85 = vmatpush1.msra.mxu0 0.0
  %86 = vmatprep.subr.mxu0 0.0
  %87 = vmatpush1.msra.mxu0 0.0
  %88 = vmatprep.subr.mxu0 0.0
  %89 = vmatpush1.msra.mxu0 0.0
  %90 = vmatprep.subr.mxu0 0.0
  %91 = vmatpush1.msra.mxu0 0.0
  %92 = vmatprep.subr.mxu0 0.0
  %93 = vmatpush1.msra.mxu0 0.0
  %94 = vmatprep.subr.mxu0 0.0
  %95 = vmatpush1.msra.mxu0 0.0
  %96 = vmatprep.subr.mxu0 0.0
  %97 = vmatpush1.msra.mxu0 0.0
  %98 = vmatprep.subr.mxu0 0.0
  %99 = vmatpush1.msra.mxu0 0.0
  %100 = vmatprep.subr.mxu0 0.0
  %101 = vmatpush1.msra.mxu0 0.0
  %102 = vmatprep.subr.mxu0 0.0
  %103 = vmatpush1.msra.mxu0 0.0
  %104 = vmatprep.mubr.f32.mxu0 0.0
  %105 = vmatmul.mubr.f32.gmra.mrb[0].mxu0 %v38
  %v106 = vpop.f32.mrb[0].mxu0
  %v107 = vadd.f32 %v34, %v106
  %v108 = vpop.f32.mrb[0].mxu0
  %109 = vdwg.mxu0
  %v110 = vmax.f32 %v107, 0.0
  %v111 = vld [vmem:[#allocation2] sm:$0xff]
  %v112 = vld [vmem:[%s3] sm:$0xff]
  %v113 = vld [vmem:[%s3 + $0x8] sm:$0xff]
  %v114 = vld [vmem:[%s3 + $0x10] sm:$0xff]
  %v115 = vld [vmem:[%s3 + $0x18] sm:$0xff]
  %vm116 = vcmask 261120
  %v118 = vsel %vm116, %v110, 0
  %120 = vmatprep.subr.mxu0 0.0
  %121 = vmatpush1.msra.mxu0 %v112
  %122 = vmatprep.subr.mxu0 0.0
  %123 = vmatpush1.msra.mxu0 %v113
  %124 = vmatprep.subr.mxu0 0.0
  %125 = vmatpush1.msra.mxu0 %v114
  %126 = vmatprep.subr.mxu0 0.0
  %127 = vmatpush1.msra.mxu0 %v115
  %128 = vmatprep.subr.mxu0 0.0
  %129 = vmatpush1.msra.mxu0 0.0
  %130 = vmatprep.subr.mxu0 0.0
  %131 = vmatpush1.msra.mxu0 0.0
  %132 = vmatprep.subr.mxu0 0.0
  %133 = vmatpush1.msra.mxu0 0.0
  %134 = vmatprep.subr.mxu0 0.0
  %135 = vmatpush1.msra.mxu0 0.0
  %136 = vmatprep.subr.mxu0 0.0
  %137 = vmatpush1.msra.mxu0 0.0
  %138 = vmatprep.subr.mxu0 0.0
  %139 = vmatpush1.msra.mxu0 0.0
  %140 = vmatprep.subr.mxu0 0.0
  %141 = vmatpush1.msra.mxu0 0.0
  %142 = vmatprep.subr.mxu0 0.0
  %143 = vmatpush1.msra.mxu0 0.0
  %144 = vmatprep.subr.mxu0 0.0
  %145 = vmatpush1.msra.mxu0 0.0
  %146 = vmatprep.subr.mxu0 0.0
  %147 = vmatpush1.msra.mxu0 0.0
  %148 = vmatprep.subr.mxu0 0.0
  %149 = vmatpush1.msra.mxu0 0.0
  %150 = vmatprep.subr.mxu0 0.0
  %151 = vmatpush1.msra.mxu0 0.0
  %152 = vmatprep.subr.mxu0 0.0
  %153 = vmatpush1.msra.mxu0 0.0
  %154 = vmatprep.subr.mxu0 0.0
  %155 = vmatpush1.msra.mxu0 0.0
  %156 = vmatprep.subr.mxu0 0.0
  %157 = vmatpush1.msra.mxu0 0.0
  %158 = vmatprep.subr.mxu0 0.0
  %159 = vmatpush1.msra.mxu0 0.0
  %160 = vmatprep.subr.mxu0 0.0
  %161 = vmatpush1.msra.mxu0 0.0
  %162 = vmatprep.subr.mxu0 0.0
  %163 = vmatpush1.msra.mxu0 0.0
  %164 = vmatprep.subr.mxu0 0.0
  %165 = vmatpush1.msra.mxu0 0.0
  %166 = vmatprep.subr.mxu0 0.0
  %167 = vmatpush1.msra.mxu0 0.0
  %168 = vmatprep.subr.mxu0 0.0
  %169 = vmatpush1.msra.mxu0 0.0
  %170 = vmatprep.subr.mxu0 0.0
  %171 = vmatpush1.msra.mxu0 0.0
  %172 = vmatprep.subr.mxu0 0.0
  %173 = vmatpush1.msra.mxu0 0.0
  %174 = vmatprep.subr.mxu0 0.0
  %175 = vmatpush1.msra.mxu0 0.0
  %176 = vmatprep.subr.mxu0 0.0
  %177 = vmatpush1.msra.mxu0 0.0
  %178 = vmatprep.subr.mxu0 0.0
  %179 = vmatpush1.msra.mxu0 0.0
  %180 = vmatprep.subr.mxu0 0.0
  %181 = vmatpush1.msra.mxu0 0.0
  %182 = vmatprep.subr.mxu0 0.0
  %183 = vmatpush1.msra.mxu0 0.0
  %184 = vmatprep.mubr.f32.mxu0 0.0
  %185 = vmatmul.mubr.f32.gmra.mrb[0].mxu0 %v118
  %v186 = vpop.f32.mrb[0].mxu0
  %v187 = vadd.f32 0.0, %v186
  %v188 = vpop.f32.mrb[0].mxu0
  %189 = vdwg.mxu0
  %v190 = vadd.f32 %v111, %v187
  %vm191 = vcmask 31744
  %192 = vst.msk [vmem:[#allocation2] sm:$0xff] %vm191, %v190
  // Predicated region
  $region26: #{net_forward.1} parent=0 // pred_check
    %p193 = pneg %p20
  $region27: #{net_forward.1} parent=0 // pred_check_branch
    %195 = sbr.rel (%p193) target = $region29
  $region28: #{net_forward.1} parent=0 // pred_region
    %v196 = vld [vmem:[#allocation2] sm:$0xff]
    %v197 = vld [vmem:[%s4] sm:$0x1]
    %v199 = vlaneseq
    %v200 = vshrl.u32 %v199, 7
    %v201 = vsub.s32 0, %v200
    %v202 = vrot.slane %v197, %v201
    %v204 = vadd.f32 %v196, %v202
    %205 = vst.msk [vmem:[%s5] sm:$0xff] %vm191, %v204
  $region29: #{net_forward.1} parent=0 // pred_fallthru
    _
  // Predicated region
  $region30: #{net_forward.1} parent=0 // pred_check
    _
  $region31: #{net_forward.1} parent=0 // pred_check_branch
    %207 = sbr.rel (0) target = $region33
  $region32: #{net_forward.1} parent=0 // pred_region
    _
  $region33: #{net_forward.1} parent=0 // pred_fallthru
    _
  // Predicated region
  $region34: #{net_forward.1} parent=0 // pred_check
    _
  $region35: #{net_forward.1} parent=0 // pred_check_branch
    %209 = sbr.rel (0) target = $region37
  $region36: #{net_forward.1} parent=0 // pred_region
    _
  $region37: #{net_forward.1} parent=0 // pred_fallthru
    _

</llo_original>
